<compile_context>
chip_gen: v6e
topology: v6e:2x2x1
jax: 0.10.0
libtpu: 0.0.40
codegen_flags: <defaults>
</compile_context>

<pallas_src>
import functools

import jax
import jax.numpy as jnp
from jax.experimental import pallas as pl
from jax.experimental.pallas import tpu as pltpu  # noqa: F401  (kept for TPU-specific tuning hooks)


def _fused_sage_kernel(adjn_ref, feat_ref, w_ref, b_ref, o_ref, *, n_layers, compute_dtype):
    """All SAGE layers in one kernel body; adjacency + weights resident in VMEM."""
    adjn = adjn_ref[...]                       # [N, N], compute_dtype (row-normalized adjacency)
    h = feat_ref[...]                          # [N, FP], f32 activations

    for l in range(n_layers):                  # static unroll over the 4 layers
        hc = h.astype(compute_dtype)           # MXU operand dtype only; activations stay f32
        # mean aggregation over in-neighbors (single MXU matmul, f32 accumulate)
        h_neigh = jnp.dot(adjn, hc, preferred_element_type=jnp.float32)          # [N, FP] f32
        # merged self + neighbor projection: [N, 2*FP] @ [2*FP, FP]
        hcat = jnp.concatenate([hc, h_neigh.astype(compute_dtype)], axis=1)       # [N, 2*FP]
        out = jnp.dot(hcat, w_ref[l], preferred_element_type=jnp.float32) + b_ref[l]
        if l < n_layers - 1:
            out = jnp.maximum(out, 0.0)        # ReLU in f32 on the VPU
        h = out

    o_ref[...] = h.astype(o_ref.dtype)


def graphsage_forward(adj, feat, params, *, compute_dtype=jnp.float32):
    """adj: [N, N] f32 dense (adj[i, j] = 1 if edge j -> i). feat: [N, in_feats] f32.
    params: list of (W_self [f_in, f_out], W_neigh [f_in, f_out], b [1, f_out])."""
    n = adj.shape[0]
    n_layers = len(params)

    # lane-dense padded feature width (multiple of 128 covering every layer width)
    dims = [feat.shape[1]] + [w.shape[1] for (w, _, _) in params]
    f_pad = 128 * pl.cdiv(max(dims), 128)

    # --- one-time prep (plain JAX, outside the kernel) ---
    # D^-1 A: mean over in-neighbors, zero rows for isolated nodes (matches 1/max(deg,1)).
    deg = jnp.sum(adj, axis=1, keepdims=True)
    adj_norm = (adj / jnp.maximum(deg, 1.0)).astype(compute_dtype)

    # zero-pad features and pack per-layer [W_self ; W_neigh] into one stacked weight tensor
    feat_p = jnp.zeros((n, f_pad), jnp.float32).at[:, : feat.shape[1]].set(feat)
    w_list, b_list = [], []
    for (w_self, w_neigh, b) in params:
        f_in, f_out = w_self.shape
        wc = jnp.zeros((2 * f_pad, f_pad), jnp.float32)
        wc = wc.at[:f_in, :f_out].set(w_self)
        wc = wc.at[f_pad : f_pad + f_in, :f_out].set(w_neigh)
        w_list.append(wc)
        b_list.append(jnp.zeros((1, f_pad), jnp.float32).at[:, :f_out].set(b))
    w_all = jnp.stack(w_list).astype(compute_dtype)   # [L, 2*FP, FP] (MXU operand dtype)
    b_all = jnp.stack(b_list)                          # [L, 1, FP] f32

    # advisory cost estimate for XLA scheduling
    itemsize = jnp.finfo(compute_dtype).bits // 8
    flops = n_layers * (2 * n * n * f_pad + 2 * n * (2 * f_pad) * f_pad)
    bytes_accessed = (n * n * itemsize                 # adj_norm
                      + n * f_pad * 4                  # feat
                      + n_layers * 2 * f_pad * f_pad * itemsize   # weights
                      + n_layers * f_pad * 4           # bias
                      + n * f_pad * 4)                 # output

    kernel = functools.partial(_fused_sage_kernel, n_layers=n_layers,
                               compute_dtype=compute_dtype)
    out = pl.pallas_call(
        kernel,
        out_shape=jax.ShapeDtypeStruct((n, f_pad), jnp.float32),
        in_specs=[
            pl.BlockSpec((n, n), lambda: (0, 0)),                       # adj_norm (resident)
            pl.BlockSpec((n, f_pad), lambda: (0, 0)),                   # padded features
            pl.BlockSpec((n_layers, 2 * f_pad, f_pad), lambda: (0, 0, 0)),  # stacked weights
            pl.BlockSpec((n_layers, 1, f_pad), lambda: (0, 0, 0)),      # stacked biases
        ],
        out_specs=pl.BlockSpec((n, f_pad), lambda: (0, 0)),
        cost_estimate=pl.CostEstimate(flops=flops, transcendentals=0,
                                      bytes_accessed=bytes_accessed),
    )(adj_norm, feat_p, w_all, b_all)

    f_out_final = params[-1][0].shape[1]
    return out[:, :f_out_final]


def init_sage_params(key, in_feats, out_feats):
    k1, k2, k3 = jax.random.split(key, 3)
    scale = 1.0 / jnp.sqrt(jnp.float32(in_feats))
    w_self = jax.random.uniform(k1, (in_feats, out_feats), jnp.float32, -scale, scale)
    w_neigh = jax.random.uniform(k2, (in_feats, out_feats), jnp.float32, -scale, scale)
    b = jax.random.uniform(k3, (1, out_feats), jnp.float32, -scale, scale)
    return w_self, w_neigh, b


def ref_forward(adj, feat, params):
    """Plain-JAX reference matching the PyTorch/DGL forward (mean aggregator)."""
    deg = jnp.maximum(jnp.sum(adj, axis=1, keepdims=True), 1.0)
    h = feat
    for i, (ws, wn, b) in enumerate(params):
        hn = (adj @ h) / deg
        h = h @ ws + hn @ wn + b
        if i < len(params) - 1:
            h = jnp.maximum(h, 0.0)
    return h


if __name__ == "__main__":
    key = jax.random.PRNGKey(0)
    k_adj, k_feat, k1, k2, k3, k4 = jax.random.split(key, 6)

    # small synthetic graph
    N = 64          # nodes
    in_feats = 16
    h_feats = 32

    # random directed adjacency (dense), ~20% density, no self-loops
    adj = (jax.random.uniform(k_adj, (N, N)) < 0.2).astype(jnp.float32)
    adj = adj * (1.0 - jnp.eye(N, dtype=jnp.float32))
    feat = jax.random.normal(k_feat, (N, in_feats), jnp.float32)

    # layers: conv1 (in->h), conv1_5_1 (h->128), conv1_5_2 (128->h), conv2 (h->h)
    params = [
        init_sage_params(k1, in_feats, h_feats),
        init_sage_params(k2, h_feats, 128),
        init_sage_params(k3, 128, h_feats),
        init_sage_params(k4, h_feats, h_feats),
    ]

    ref = ref_forward(adj, feat, params)

    # f32 MXU operands: matches the reference to tight tolerance
    out_f32 = jax.block_until_ready(
        graphsage_forward(adj, feat, params, compute_dtype=jnp.float32))
    assert out_f32.shape == (N, h_feats)
    assert jnp.allclose(out_f32, ref, atol=1e-4, rtol=1e-4), \
        float(jnp.max(jnp.abs(out_f32 - ref)))

    # bf16 MXU operands (v5e/v6e/v7x native), f32 accumulate + f32 bias/ReLU: looser check
    out_bf16 = jax.block_until_ready(
        graphsage_forward(adj, feat, params, compute_dtype=jnp.bfloat16))
    scale = float(jnp.max(jnp.abs(ref)))
    err = float(jnp.max(jnp.abs(out_bf16 - ref)))
    assert err < 0.1 * scale, (err, scale)

    print("KERNEL_OK")
</pallas_src>

<mosaic_0001>
module attributes {stable_mosaic.version = 11 : i64} {
  func.func @_fused_sage_kernel(%arg0: memref<64x64xf32, #tpu.memory_space<vmem>>, %arg1: memref<64x128xf32, #tpu.memory_space<vmem>>, %arg2: memref<4x256x128xf32, #tpu.memory_space<vmem>>, %arg3: memref<4x1x128xf32, #tpu.memory_space<vmem>>, %arg4: memref<64x128xf32, #tpu.memory_space<vmem>>) attributes {dimension_semantics = [], scalar_prefetch = 0 : i64, scratch_operands = 0 : i64, tpu.core_type = #tpu.core_type<tc>} {
    %c0 = arith.constant 0 : index
    %c0_0 = arith.constant 0 : index
    %0 = vector.load %arg0[%c0, %c0_0] : memref<64x64xf32, #tpu.memory_space<vmem>>, vector<64x64xf32>
    %c0_1 = arith.constant 0 : index
    %c0_2 = arith.constant 0 : index
    %1 = vector.load %arg1[%c0_1, %c0_2] : memref<64x128xf32, #tpu.memory_space<vmem>>, vector<64x128xf32>
    %cst = arith.constant dense<0.000000e+00> : vector<64x128xf32>
    %2 = tpu.matmul %0, %1, %cst {dimension_numbers = #tpu.dot_dimension_numbers<[1], [0], [0], [1], [0, 0, 1, 1], [], []>} : vector<64x64xf32>, vector<64x128xf32>, vector<64x128xf32> -> vector<64x128xf32>
    %3 = tpu.concatenate %1, %2 in 1 : vector<64x128xf32>, vector<64x128xf32> -> vector<64x256xf32>
    %c0_3 = arith.constant 0 : index
    %c0_4 = arith.constant 0 : index
    %c0_5 = arith.constant 0 : index
    %4 = vector.load %arg2[%c0_3, %c0_4, %c0_5] : memref<4x256x128xf32, #tpu.memory_space<vmem>>, vector<1x256x128xf32>
    %5 = vector.shape_cast %4 : vector<1x256x128xf32> to vector<256x128xf32>
    %cst_6 = arith.constant dense<0.000000e+00> : vector<64x128xf32>
    %6 = tpu.matmul %3, %5, %cst_6 {dimension_numbers = #tpu.dot_dimension_numbers<[1], [0], [0], [1], [0, 0, 1, 1], [], []>} : vector<64x256xf32>, vector<256x128xf32>, vector<64x128xf32> -> vector<64x128xf32>
    %c0_7 = arith.constant 0 : index
    %c0_8 = arith.constant 0 : index
    %c0_9 = arith.constant 0 : index
    %7 = vector.load %arg3[%c0_7, %c0_8, %c0_9] : memref<4x1x128xf32, #tpu.memory_space<vmem>>, vector<1x1x128xf32>
    %8 = vector.shape_cast %7 : vector<1x1x128xf32> to vector<1x128xf32>
    %9 = vector.broadcast %8 : vector<1x128xf32> to vector<64x128xf32>
    %10 = arith.addf %6, %9 : vector<64x128xf32>
    %cst_10 = arith.constant 0.000000e+00 : f32
    %11 = vector.broadcast %cst_10 : f32 to vector<64x128xf32>
    %12 = arith.maximumf %10, %11 : vector<64x128xf32>
    %cst_11 = arith.constant dense<0.000000e+00> : vector<64x128xf32>
    %13 = tpu.matmul %0, %12, %cst_11 {dimension_numbers = #tpu.dot_dimension_numbers<[1], [0], [0], [1], [0, 0, 1, 1], [], []>} : vector<64x64xf32>, vector<64x128xf32>, vector<64x128xf32> -> vector<64x128xf32>
    %14 = tpu.concatenate %12, %13 in 1 : vector<64x128xf32>, vector<64x128xf32> -> vector<64x256xf32>
    %c1 = arith.constant 1 : index
    %c0_12 = arith.constant 0 : index
    %c0_13 = arith.constant 0 : index
    %15 = vector.load %arg2[%c1, %c0_12, %c0_13] : memref<4x256x128xf32, #tpu.memory_space<vmem>>, vector<1x256x128xf32>
    %16 = vector.shape_cast %15 : vector<1x256x128xf32> to vector<256x128xf32>
    %cst_14 = arith.constant dense<0.000000e+00> : vector<64x128xf32>
    %17 = tpu.matmul %14, %16, %cst_14 {dimension_numbers = #tpu.dot_dimension_numbers<[1], [0], [0], [1], [0, 0, 1, 1], [], []>} : vector<64x256xf32>, vector<256x128xf32>, vector<64x128xf32> -> vector<64x128xf32>
    %c1_15 = arith.constant 1 : index
    %c0_16 = arith.constant 0 : index
    %c0_17 = arith.constant 0 : index
    %18 = vector.load %arg3[%c1_15, %c0_16, %c0_17] : memref<4x1x128xf32, #tpu.memory_space<vmem>>, vector<1x1x128xf32>
    %19 = vector.shape_cast %18 : vector<1x1x128xf32> to vector<1x128xf32>
    %20 = vector.broadcast %19 : vector<1x128xf32> to vector<64x128xf32>
    %21 = arith.addf %17, %20 : vector<64x128xf32>
    %cst_18 = arith.constant 0.000000e+00 : f32
    %22 = vector.broadcast %cst_18 : f32 to vector<64x128xf32>
    %23 = arith.maximumf %21, %22 : vector<64x128xf32>
    %cst_19 = arith.constant dense<0.000000e+00> : vector<64x128xf32>
    %24 = tpu.matmul %0, %23, %cst_19 {dimension_numbers = #tpu.dot_dimension_numbers<[1], [0], [0], [1], [0, 0, 1, 1], [], []>} : vector<64x64xf32>, vector<64x128xf32>, vector<64x128xf32> -> vector<64x128xf32>
    %25 = tpu.concatenate %23, %24 in 1 : vector<64x128xf32>, vector<64x128xf32> -> vector<64x256xf32>
    %c2 = arith.constant 2 : index
    %c0_20 = arith.constant 0 : index
    %c0_21 = arith.constant 0 : index
    %26 = vector.load %arg2[%c2, %c0_20, %c0_21] : memref<4x256x128xf32, #tpu.memory_space<vmem>>, vector<1x256x128xf32>
    %27 = vector.shape_cast %26 : vector<1x256x128xf32> to vector<256x128xf32>
    %cst_22 = arith.constant dense<0.000000e+00> : vector<64x128xf32>
    %28 = tpu.matmul %25, %27, %cst_22 {dimension_numbers = #tpu.dot_dimension_numbers<[1], [0], [0], [1], [0, 0, 1, 1], [], []>} : vector<64x256xf32>, vector<256x128xf32>, vector<64x128xf32> -> vector<64x128xf32>
    %c2_23 = arith.constant 2 : index
    %c0_24 = arith.constant 0 : index
    %c0_25 = arith.constant 0 : index
    %29 = vector.load %arg3[%c2_23, %c0_24, %c0_25] : memref<4x1x128xf32, #tpu.memory_space<vmem>>, vector<1x1x128xf32>
    %30 = vector.shape_cast %29 : vector<1x1x128xf32> to vector<1x128xf32>
    %31 = vector.broadcast %30 : vector<1x128xf32> to vector<64x128xf32>
    %32 = arith.addf %28, %31 : vector<64x128xf32>
    %cst_26 = arith.constant 0.000000e+00 : f32
    %33 = vector.broadcast %cst_26 : f32 to vector<64x128xf32>
    %34 = arith.maximumf %32, %33 : vector<64x128xf32>
    %cst_27 = arith.constant dense<0.000000e+00> : vector<64x128xf32>
    %35 = tpu.matmul %0, %34, %cst_27 {dimension_numbers = #tpu.dot_dimension_numbers<[1], [0], [0], [1], [0, 0, 1, 1], [], []>} : vector<64x64xf32>, vector<64x128xf32>, vector<64x128xf32> -> vector<64x128xf32>
    %36 = tpu.concatenate %34, %35 in 1 : vector<64x128xf32>, vector<64x128xf32> -> vector<64x256xf32>
    %c3 = arith.constant 3 : index
    %c0_28 = arith.constant 0 : index
    %c0_29 = arith.constant 0 : index
    %37 = vector.load %arg2[%c3, %c0_28, %c0_29] : memref<4x256x128xf32, #tpu.memory_space<vmem>>, vector<1x256x128xf32>
    %38 = vector.shape_cast %37 : vector<1x256x128xf32> to vector<256x128xf32>
    %cst_30 = arith.constant dense<0.000000e+00> : vector<64x128xf32>
    %39 = tpu.matmul %36, %38, %cst_30 {dimension_numbers = #tpu.dot_dimension_numbers<[1], [0], [0], [1], [0, 0, 1, 1], [], []>} : vector<64x256xf32>, vector<256x128xf32>, vector<64x128xf32> -> vector<64x128xf32>
    %c3_31 = arith.constant 3 : index
    %c0_32 = arith.constant 0 : index
    %c0_33 = arith.constant 0 : index
    %40 = vector.load %arg3[%c3_31, %c0_32, %c0_33] : memref<4x1x128xf32, #tpu.memory_space<vmem>>, vector<1x1x128xf32>
    %41 = vector.shape_cast %40 : vector<1x1x128xf32> to vector<1x128xf32>
    %42 = vector.broadcast %41 : vector<1x128xf32> to vector<64x128xf32>
    %43 = arith.addf %39, %42 : vector<64x128xf32>
    %c0_34 = arith.constant 0 : index
    %c0_35 = arith.constant 0 : index
    %44 = vector.load %arg4[%c0_34, %c0_35] : memref<64x128xf32, #tpu.memory_space<vmem>>, vector<64x128xf32>
    tpu.vector_store %arg4[%c0_34, %c0_35], %43 {strides = array<i32>} : memref<64x128xf32, #tpu.memory_space<vmem>>, vector<64x128xf32>,
    return
  }
}

</mosaic_0001>

<llo_original>
// kernel: tpu_custom_call.1
$region0: #{tpu_custom_call.1}
  #allocation0 [shape = 'u32[]', space=smem, size = 0x4, offset = 0x4, fixed_abs, tag = 'smem constant byte address 0x4 - core index']
  #allocation1 [shape = 'u32[144,128]{1,0:T(1,128)}', space=vmem, size = 0x12000, scoped, tag = 'internal scratch']
  %s0 = inlined_call_operand.hbm [shape: f32[64,64], index: 0, kind: input, shape index: {}]
  %s1 = inlined_call_operand.hbm [shape: f32[64,128], index: 1, kind: input, shape index: {}]
  %s2 = inlined_call_operand.hbm [shape: f32[4,256,128], index: 2, kind: input, shape index: {}]
  %s3 = inlined_call_operand.vmem [shape: f32[4,1,128], index: 3, kind: input, shape index: {}]
  %s4 = inlined_call_operand.hbm [shape: f32[64,128], index: 4, kind: output, shape index: {}]
  %s5 = sld [smem:[#allocation0]]
  $region38: #{tpu_custom_call.1} parent=0
    _
  %s7 = ssub.s32 1, %s5
  %s8 = scalar_select 0, %s7, %s5
  $region1: #{tpu_custom_call.1} parent=0
    #allocation2 [shape = 'u8[32768]{0}', space=vmem, size = 0x8000, scoped, tag = 'input window, operand 0, single buffered']
    #allocation3 [shape = 's32[1]{0}', space=sflag, size = 0x4, scoped, tag = 'scoped memory for tpu_custom_call.1']
    #allocation4 [shape = 's32[1]{0}', space=sflag, size = 0x4, scoped, tag = 'scoped memory for tpu_custom_call.1']
    #allocation5 [shape = 'u8[32768]{0}', space=vmem, size = 0x8000, scoped, tag = 'input window, operand 1, single buffered']
    #allocation6 [shape = 's32[1]{0}', space=sflag, size = 0x4, scoped, tag = 'scoped memory for tpu_custom_call.1']
    #allocation7 [shape = 'u8[524288]{0}', space=vmem, size = 0x80000, scoped, tag = 'input window, operand 2, single buffered']
    #allocation8 [shape = 'u8[32768]{0}', space=vmem, size = 0x8000, scoped, tag = 'output window, operand 0, single buffered']
    %9 = vsyncpa [#allocation3], 0
    %10 = vsyncpa [#allocation6], 0
    %11 = vsyncpa [#allocation4], 0
    // Predicated region
    $region2: #{tpu_custom_call.1} parent=1 // pred_check
      _
    $region3: #{tpu_custom_call.1} parent=1 // pred_check_branch
      %13 = sbr.rel (0) target = $region5
    $region4: #{tpu_custom_call.1} parent=1 // pred_region
      %s15 = ssub.s32 1024, 1024
      %16 = vsyncadd [#allocation3], %s15
      %s17 = sshll.u32 [#allocation2], 4
      %s18 = int_to_ptr.vmem [resolvable:$true] %s17
      %23 = dma.hbm_to_vmem [thread:$0]  %s0, 1024, %s18, [#allocation3], 128, 128, 8
    $region5: #{tpu_custom_call.1} parent=1 // pred_fallthru
      _
    // Predicated region
    $region6: #{tpu_custom_call.1} parent=1 // pred_check
      _
    $region7: #{tpu_custom_call.1} parent=1 // pred_check_branch
      %25 = sbr.rel (0) target = $region9
    $region8: #{tpu_custom_call.1} parent=1 // pred_region
      %s27 = ssub.s32 1024, 1024
      %28 = vsyncadd [#allocation6], %s27
      %s29 = sshll.u32 [#allocation5], 4
      %s30 = int_to_ptr.vmem [resolvable:$true] %s29
      %35 = dma.hbm_to_vmem [thread:$0]  %s1, 1024, %s30, [#allocation6], 128, 128, 8
    $region9: #{tpu_custom_call.1} parent=1 // pred_fallthru
      _
    // Predicated region
    $region10: #{tpu_custom_call.1} parent=1 // pred_check
      _
    $region11: #{tpu_custom_call.1} parent=1 // pred_check_branch
      %37 = sbr.rel (0) target = $region13
    $region12: #{tpu_custom_call.1} parent=1 // pred_region
      %s39 = ssub.s32 16384, 16384
      %40 = vsyncadd [#allocation6], %s39
      %s41 = sshll.u32 [#allocation7], 4
      %s42 = int_to_ptr.vmem [resolvable:$true] %s41
      %47 = dma.hbm_to_vmem [thread:$0]  %s2, 16384, %s42, [#allocation6], 128, 128, 8
    $region13: #{tpu_custom_call.1} parent=1 // pred_fallthru
      _
    // Predicated region
    $region14: #{tpu_custom_call.1} parent=1 // pred_check
      _
    $region15: #{tpu_custom_call.1} parent=1 // pred_check_branch
      %49 = sbr.rel (0) target = $region17
    $region16: #{tpu_custom_call.1} parent=1 // pred_region
      _
    $region17: #{tpu_custom_call.1} parent=1 // pred_fallthru
      _
    // Predicated region
    $region18: #{tpu_custom_call.1} parent=1 // pred_check
      _
    $region19: #{tpu_custom_call.1} parent=1 // pred_check_branch
      %51 = sbr.rel (0) target = $region21
    $region20: #{tpu_custom_call.1} parent=1 // pred_region
      %52 = dma.done [#allocation3], 1024
    $region21: #{tpu_custom_call.1} parent=1 // pred_fallthru
      _
    // Predicated region
    $region22: #{tpu_custom_call.1} parent=1 // pred_check
      _
    $region23: #{tpu_custom_call.1} parent=1 // pred_check_branch
      %54 = sbr.rel (0) target = $region25
    $region24: #{tpu_custom_call.1} parent=1 // pred_region
      %55 = dma.done [#allocation6], 1024
    $region25: #{tpu_custom_call.1} parent=1 // pred_fallthru
      _
    // Predicated region
    $region26: #{tpu_custom_call.1} parent=1 // pred_check
      _
    $region27: #{tpu_custom_call.1} parent=1 // pred_check_branch
      %57 = sbr.rel (0) target = $region29
    $region28: #{tpu_custom_call.1} parent=1 // pred_region
      %58 = dma.done [#allocation6], 16384
    $region29: #{tpu_custom_call.1} parent=1 // pred_fallthru
      _
    %v59 = vld [vmem:[#allocation2] sm:$0xff]
    %v60 = vld [vmem:[#allocation2 + $0x8] sm:$0xff]
    %v61 = vld [vmem:[#allocation2 + $0x10] sm:$0xff]
    %v62 = vld [vmem:[#allocation2 + $0x18] sm:$0xff]
    %v63 = vld [vmem:[#allocation2 + $0x20] sm:$0xff]
    %v64 = vld [vmem:[#allocation2 + $0x28] sm:$0xff]
    %v65 = vld [vmem:[#allocation2 + $0x30] sm:$0xff]
    %v66 = vld [vmem:[#allocation2 + $0x38] sm:$0xff]
    %v67 = vld [vmem:[#allocation5] sm:$0xff]
    %v68 = vld [vmem:[#allocation5 + $0x8] sm:$0xff]
    %v69 = vld [vmem:[#allocation5 + $0x10] sm:$0xff]
    %v70 = vld [vmem:[#allocation5 + $0x18] sm:$0xff]
    %v71 = vld [vmem:[#allocation5 + $0x20] sm:$0xff]
    %v72 = vld [vmem:[#allocation5 + $0x28] sm:$0xff]
    %v73 = vld [vmem:[#allocation5 + $0x30] sm:$0xff]
    %v74 = vld [vmem:[#allocation5 + $0x38] sm:$0xff]
    %vm75 = vcmask 523264
    %v77 = vsel %vm75, %v59, 0
    %v80 = vsel %vm75, %v60, 0
    %v83 = vsel %vm75, %v61, 0
    %v86 = vsel %vm75, %v62, 0
    %v89 = vsel %vm75, %v63, 0
    %v92 = vsel %vm75, %v64, 0
    %v95 = vsel %vm75, %v65, 0
    %v98 = vsel %vm75, %v66, 0
    %100 = vmatprep.subr.mxu0 0.0
    %101 = vmatpush1.msra.mxu0 0.0
    %102 = vmatprep.subr.mxu0 0.0
    %103 = vmatpush1.msra.mxu0 0.0
    %104 = vmatprep.subr.mxu0 0.0
    %105 = vmatpush1.msra.mxu0 0.0
    %106 = vmatprep.subr.mxu0 0.0
    %107 = vmatpush1.msra.mxu0 0.0
    %108 = vmatprep.subr.mxu0 0.0
    %109 = vmatpush1.msra.mxu0 0.0
    %110 = vmatprep.subr.mxu0 0.0
    %111 = vmatpush1.msra.mxu0 0.0
    %112 = vmatprep.subr.mxu0 0.0
    %113 = vmatpush1.msra.mxu0 0.0
    %114 = vmatprep.subr.mxu0 0.0
    %115 = vmatpush1.msra.mxu0 0.0
    %116 = vmatprep.subr.mxu0 0.0
    %117 = vmatpush1.msra.mxu0 %v74
    %118 = vmatprep.subr.mxu0 0.0
    %119 = vmatpush1.msra.mxu0 %v73
    %120 = vmatprep.subr.mxu0 0.0
    %121 = vmatpush1.msra.mxu0 %v72
    %122 = vmatprep.subr.mxu0 0.0
    %123 = vmatpush1.msra.mxu0 %v71
    %124 = vmatprep.subr.mxu0 0.0
    %125 = vmatpush1.msra.mxu0 %v70
    %126 = vmatprep.subr.mxu0 0.0
    %127 = vmatpush1.msra.mxu0 %v69
    %128 = vmatprep.subr.mxu0 0.0
    %129 = vmatpush1.msra.mxu0 %v68
    %130 = vmatprep.subr.mxu0 0.0
    %131 = vmatpush1.msra.mxu0 %v67
    %132 = vmatprep.subr.mxu0 0.0
    %133 = vmatpush2.msra.mxu0 0.0
    %134 = vmatprep.subr.mxu0 0.0
    %135 = vmatpush2.msra.mxu0 0.0
    %136 = vmatprep.subr.mxu0 0.0
    %137 = vmatpush2.msra.mxu0 0.0
    %138 = vmatprep.subr.mxu0 0.0
    %139 = vmatpush2.msra.mxu0 0.0
    %140 = vmatprep.subr.mxu0 0.0
    %141 = vmatpush2.msra.mxu0 0.0
    %142 = vmatprep.subr.mxu0 0.0
    %143 = vmatpush2.msra.mxu0 0.0
    %144 = vmatprep.subr.mxu0 0.0
    %145 = vmatpush2.msra.mxu0 0.0
    %146 = vmatprep.subr.mxu0 0.0
    %147 = vmatpush2.msra.mxu0 0.0
    %148 = vmatprep.subr.mxu0 0.0
    %149 = vmatpush2.msra.mxu0 0.0
    %150 = vmatprep.subr.mxu0 0.0
    %151 = vmatpush2.msra.mxu0 0.0
    %152 = vmatprep.subr.mxu0 0.0
    %153 = vmatpush2.msra.mxu0 0.0
    %154 = vmatprep.subr.mxu0 0.0
    %155 = vmatpush2.msra.mxu0 0.0
    %156 = vmatprep.subr.mxu0 0.0
    %157 = vmatpush2.msra.mxu0 0.0
    %158 = vmatprep.subr.mxu0 0.0
    %159 = vmatpush2.msra.mxu0 0.0
    %160 = vmatprep.subr.mxu0 0.0
    %161 = vmatpush2.msra.mxu0 0.0
    %162 = vmatprep.subr.mxu0 0.0
    %163 = vmatpush2.msra.mxu0 0.0
    %164 = vmatprep.mubr.f32.mxu0 0.0
    %165 = vmatmul.mubr.f32.gmra.mxu0 %v77
    %v166 = vpop.f32.mrf.mxu0
    %v167 = vadd.f32 0.0, %v166
    %v168 = vpop.f32.mrf.mxu0
    %169 = vmatprep.mubr.f32.mxu0 0.0
    %170 = vmatmul.mubr.f32.gmra.mxu0 %v80
    %v171 = vpop.f32.mrf.mxu0
    %v172 = vadd.f32 0.0, %v171
    %v173 = vpop.f32.mrf.mxu0
    %174 = vmatprep.mubr.f32.mxu0 0.0
    %175 = vmatmul.mubr.f32.gmra.mxu0 %v83
    %v176 = vpop.f32.mrf.mxu0
    %v177 = vadd.f32 0.0, %v176
    %v178 = vpop.f32.mrf.mxu0
    %179 = vmatprep.mubr.f32.mxu0 0.0
    %180 = vmatmul.mubr.f32.gmra.mxu0 %v86
    %v181 = vpop.f32.mrf.mxu0
    %v182 = vadd.f32 0.0, %v181
    %v183 = vpop.f32.mrf.mxu0
    %184 = vmatprep.mubr.f32.mxu0 0.0
    %185 = vmatmul.mubr.f32.gmra.mxu0 %v89
    %v186 = vpop.f32.mrf.mxu0
    %v187 = vadd.f32 0.0, %v186
    %v188 = vpop.f32.mrf.mxu0
    %189 = vmatprep.mubr.f32.mxu0 0.0
    %190 = vmatmul.mubr.f32.gmra.mxu0 %v92
    %v191 = vpop.f32.mrf.mxu0
    %v192 = vadd.f32 0.0, %v191
    %v193 = vpop.f32.mrf.mxu0
    %194 = vmatprep.mubr.f32.mxu0 0.0
    %195 = vmatmul.mubr.f32.gmra.mxu0 %v95
    %v196 = vpop.f32.mrf.mxu0
    %v197 = vadd.f32 0.0, %v196
    %v198 = vpop.f32.mrf.mxu0
    %199 = vmatprep.mubr.f32.mxu0 0.0
    %200 = vmatmul.mubr.f32.gmra.mxu0 %v98
    %v201 = vpop.f32.mrf.mxu0
    %v202 = vadd.f32 0.0, %v201
    %v203 = vpop.f32.mrf.mxu0
    %204 = vdwg.mxu0
    %v205 = vld [vmem:[#allocation7] sm:$0xff]
    %v206 = vld [vmem:[#allocation7 + $0x8] sm:$0xff]
    %v207 = vld [vmem:[#allocation7 + $0x10] sm:$0xff]
    %v208 = vld [vmem:[#allocation7 + $0x18] sm:$0xff]
    %v209 = vld [vmem:[#allocation7 + $0x20] sm:$0xff]
    %v210 = vld [vmem:[#allocation7 + $0x28] sm:$0xff]
    %v211 = vld [vmem:[#allocation7 + $0x30] sm:$0xff]
    %v212 = vld [vmem:[#allocation7 + $0x38] sm:$0xff]
    %v213 = vld [vmem:[#allocation7 + $0x40] sm:$0xff]
    %v214 = vld [vmem:[#allocation7 + $0x48] sm:$0xff]
    %v215 = vld [vmem:[#allocation7 + $0x50] sm:$0xff]
    %v216 = vld [vmem:[#allocation7 + $0x58] sm:$0xff]
    %v217 = vld [vmem:[#allocation7 + $0x60] sm:$0xff]
    %v218 = vld [vmem:[#allocation7 + $0x68] sm:$0xff]
    %v219 = vld [vmem:[#allocation7 + $0x70] sm:$0xff]
    %v220 = vld [vmem:[#allocation7 + $0x78] sm:$0xff]
    %v221 = vld [vmem:[#allocation7 + $0x80] sm:$0xff]
    %v222 = vld [vmem:[#allocation7 + $0x88] sm:$0xff]
    %v223 = vld [vmem:[#allocation7 + $0x90] sm:$0xff]
    %v224 = vld [vmem:[#allocation7 + $0x98] sm:$0xff]
    %v225 = vld [vmem:[#allocation7 + $0xa0] sm:$0xff]
    %v226 = vld [vmem:[#allocation7 + $0xa8] sm:$0xff]
    %v227 = vld [vmem:[#allocation7 + $0xb0] sm:$0xff]
    %v228 = vld [vmem:[#allocation7 + $0xb8] sm:$0xff]
    %v229 = vld [vmem:[#allocation7 + $0xc0] sm:$0xff]
    %v230 = vld [vmem:[#allocation7 + $0xc8] sm:$0xff]
    %v231 = vld [vmem:[#allocation7 + $0xd0] sm:$0xff]
    %v232 = vld [vmem:[#allocation7 + $0xd8] sm:$0xff]
    %v233 = vld [vmem:[#allocation7 + $0xe0] sm:$0xff]
    %v234 = vld [vmem:[#allocation7 + $0xe8] sm:$0xff]
    %v235 = vld [vmem:[#allocation7 + $0xf0] sm:$0xff]
    %v236 = vld [vmem:[#allocation7 + $0xf8] sm:$0xff]
    %v237 = vld [vmem:[%s3] sm:$0x1]
    %v239 = vlaneseq
    %v240 = vshrl.u32 %v239, 7
    %v241 = vsub.s32 0, %v240
    %v242 = vrot.slane %v237, %v241
    %244 = vmatprep.subr.mxu0 0.0
    %245 = vmatpush1.msra.mxu0 %v220
    %246 = vmatprep.subr.mxu0 0.0
    %247 = vmatpush1.msra.mxu0 %v219
    %248 = vmatprep.subr.mxu0 0.0
    %249 = vmatpush1.msra.mxu0 %v218
    %250 = vmatprep.subr.mxu0 0.0
    %251 = vmatpush1.msra.mxu0 %v217
    %252 = vmatprep.subr.mxu0 0.0
    %253 = vmatpush1.msra.mxu0 %v216
    %254 = vmatprep.subr.mxu0 0.0
    %255 = vmatpush1.msra.mxu0 %v215
    %256 = vmatprep.subr.mxu0 0.0
    %257 = vmatpush1.msra.mxu0 %v214
    %258 = vmatprep.subr.mxu0 0.0
    %259 = vmatpush1.msra.mxu0 %v213
    %260 = vmatprep.subr.mxu0 0.0
    %261 = vmatpush1.msra.mxu0 %v212
    %262 = vmatprep.subr.mxu0 0.0
    %263 = vmatpush1.msra.mxu0 %v211
    %264 = vmatprep.subr.mxu0 0.0
    %265 = vmatpush1.msra.mxu0 %v210
    %266 = vmatprep.subr.mxu0 0.0
    %267 = vmatpush1.msra.mxu0 %v209
    %268 = vmatprep.subr.mxu0 0.0
    %269 = vmatpush1.msra.mxu0 %v208
    %270 = vmatprep.subr.mxu0 0.0
    %271 = vmatpush1.msra.mxu0 %v207
    %272 = vmatprep.subr.mxu0 0.0
    %273 = vmatpush1.msra.mxu0 %v206
    %274 = vmatprep.subr.mxu0 0.0
    %275 = vmatpush1.msra.mxu0 %v205
    %276 = vmatprep.subr.mxu0 0.0
    %277 = vmatpush2.msra.mxu0 %v236
    %278 = vmatprep.subr.mxu0 0.0
    %279 = vmatpush2.msra.mxu0 %v235
    %280 = vmatprep.subr.mxu0 0.0
    %281 = vmatpush2.msra.mxu0 %v234
    %282 = vmatprep.subr.mxu0 0.0
    %283 = vmatpush2.msra.mxu0 %v233
    %284 = vmatprep.subr.mxu0 0.0
    %285 = vmatpush2.msra.mxu0 %v232
    %286 = vmatprep.subr.mxu0 0.0
    %287 = vmatpush2.msra.mxu0 %v231
    %288 = vmatprep.subr.mxu0 0.0
    %289 = vmatpush2.msra.mxu0 %v230
    %290 = vmatprep.subr.mxu0 0.0
    %291 = vmatpush2.msra.mxu0 %v229
    %292 = vmatprep.subr.mxu0 0.0
    %293 = vmatpush2.msra.mxu0 %v228
    %294 = vmatprep.subr.mxu0 0.0
    %295 = vmatpush2.msra.mxu0 %v227
    %296 = vmatprep.subr.mxu0 0.0
    %297 = vmatpush2.msra.mxu0 %v226
    %298 = vmatprep.subr.mxu0 0.0
    %299 = vmatpush2.msra.mxu0 %v225
    %300 = vmatprep.subr.mxu0 0.0
    %301 = vmatpush2.msra.mxu0 %v224
    %302 = vmatprep.subr.mxu0 0.0
    %303 = vmatpush2.msra.mxu0 %v223
    %304 = vmatprep.subr.mxu0 0.0
    %305 = vmatpush2.msra.mxu0 %v222
    %306 = vmatprep.subr.mxu0 0.0
    %307 = vmatpush2.msra.mxu0 %v221
    %308 = vmatprep.mubr.f32.mxu0 %v167
    %309 = vmatmul.mubr.f32.gmra.mxu0 %v67
    %v310 = vpop.f32.mrf.mxu0
    %v311 = vadd.f32 %v242, %v310
    %v312 = vpop.f32.mrf.mxu0
    %313 = vmatprep.mubr.f32.mxu0 %v172
    %314 = vmatmul.mubr.f32.gmra.mxu0 %v68
    %v315 = vpop.f32.mrf.mxu0
    %v316 = vadd.f32 %v242, %v315
    %v317 = vpop.f32.mrf.mxu0
    %318 = vmatprep.mubr.f32.mxu0 %v177
    %319 = vmatmul.mubr.f32.gmra.mxu0 %v69
    %v320 = vpop.f32.mrf.mxu0
    %v321 = vadd.f32 %v242, %v320
    %v322 = vpop.f32.mrf.mxu0
    %323 = vmatprep.mubr.f32.mxu0 %v182
    %324 = vmatmul.mubr.f32.gmra.mxu0 %v70
    %v325 = vpop.f32.mrf.mxu0
    %v326 = vadd.f32 %v242, %v325
    %v327 = vpop.f32.mrf.mxu0
    %328 = vmatprep.mubr.f32.mxu0 %v187
    %329 = vmatmul.mubr.f32.gmra.mxu0 %v71
    %v330 = vpop.f32.mrf.mxu0
    %v331 = vadd.f32 %v242, %v330
    %v332 = vpop.f32.mrf.mxu0
    %333 = vmatprep.mubr.f32.mxu0 %v192
    %334 = vmatmul.mubr.f32.gmra.mxu0 %v72
    %v335 = vpop.f32.mrf.mxu0
    %v336 = vadd.f32 %v242, %v335
    %v337 = vpop.f32.mrf.mxu0
    %338 = vmatprep.mubr.f32.mxu0 %v197
    %339 = vmatmul.mubr.f32.gmra.mxu0 %v73
    %v340 = vpop.f32.mrf.mxu0
    %v341 = vadd.f32 %v242, %v340
    %v342 = vpop.f32.mrf.mxu0
    %343 = vmatprep.mubr.f32.mxu0 %v202
    %344 = vmatmul.mubr.f32.gmra.mxu0 %v74
    %v345 = vpop.f32.mrf.mxu0
    %v346 = vadd.f32 %v242, %v345
    %v347 = vpop.f32.mrf.mxu0
    %348 = vdwg.mxu0
    %v349 = vmax.f32 %v311, 0.0
    %v350 = vmax.f32 %v316, 0.0
    %v351 = vmax.f32 %v321, 0.0
    %v352 = vmax.f32 %v326, 0.0
    %v353 = vmax.f32 %v331, 0.0
    %v354 = vmax.f32 %v336, 0.0
    %v355 = vmax.f32 %v341, 0.0
    %v356 = vmax.f32 %v346, 0.0
    %357 = vmatprep.subr.mxu0 0.0
    %358 = vmatpush1.msra.mxu0 0.0
    %359 = vmatprep.subr.mxu0 0.0
    %360 = vmatpush1.msra.mxu0 0.0
    %361 = vmatprep.subr.mxu0 0.0
    %362 = vmatpush1.msra.mxu0 0.0
    %363 = vmatprep.subr.mxu0 0.0
    %364 = vmatpush1.msra.mxu0 0.0
    %365 = vmatprep.subr.mxu0 0.0
    %366 = vmatpush1.msra.mxu0 0.0
    %367 = vmatprep.subr.mxu0 0.0
    %368 = vmatpush1.msra.mxu0 0.0
    %369 = vmatprep.subr.mxu0 0.0
    %370 = vmatpush1.msra.mxu0 0.0
    %371 = vmatprep.subr.mxu0 0.0
    %372 = vmatpush1.msra.mxu0 0.0
    %373 = vmatprep.subr.mxu0 0.0
    %374 = vmatpush1.msra.mxu0 %v356
    %375 = vmatprep.subr.mxu0 0.0
    %376 = vmatpush1.msra.mxu0 %v355
    %377 = vmatprep.subr.mxu0 0.0
    %378 = vmatpush1.msra.mxu0 %v354
    %379 = vmatprep.subr.mxu0 0.0
    %380 = vmatpush1.msra.mxu0 %v353
    %381 = vmatprep.subr.mxu0 0.0
    %382 = vmatpush1.msra.mxu0 %v352
    %383 = vmatprep.subr.mxu0 0.0
    %384 = vmatpush1.msra.mxu0 %v351
    %385 = vmatprep.subr.mxu0 0.0
    %386 = vmatpush1.msra.mxu0 %v350
    %387 = vmatprep.subr.mxu0 0.0
    %388 = vmatpush1.msra.mxu0 %v349
    %389 = vmatprep.subr.mxu0 0.0
    %390 = vmatpush2.msra.mxu0 0.0
    %391 = vmatprep.subr.mxu0 0.0
    %392 = vmatpush2.msra.mxu0 0.0
    %393 = vmatprep.subr.mxu0 0.0
    %394 = vmatpush2.msra.mxu0 0.0
    %395 = vmatprep.subr.mxu0 0.0
    %396 = vmatpush2.msra.mxu0 0.0
    %397 = vmatprep.subr.mxu0 0.0
    %398 = vmatpush2.msra.mxu0 0.0
    %399 = vmatprep.subr.mxu0 0.0
    %400 = vmatpush2.msra.mxu0 0.0
    %401 = vmatprep.subr.mxu0 0.0
    %402 = vmatpush2.msra.mxu0 0.0
    %403 = vmatprep.subr.mxu0 0.0
    %404 = vmatpush2.msra.mxu0 0.0
    %405 = vmatprep.subr.mxu0 0.0
    %406 = vmatpush2.msra.mxu0 0.0
    %407 = vmatprep.subr.mxu0 0.0
    %408 = vmatpush2.msra.mxu0 0.0
    %409 = vmatprep.subr.mxu0 0.0
    %410 = vmatpush2.msra.mxu0 0.0
    %411 = vmatprep.subr.mxu0 0.0
    %412 = vmatpush2.msra.mxu0 0.0
    %413 = vmatprep.subr.mxu0 0.0
    %414 = vmatpush2.msra.mxu0 0.0
    %415 = vmatprep.subr.mxu0 0.0
    %416 = vmatpush2.msra.mxu0 0.0
    %417 = vmatprep.subr.mxu0 0.0
    %418 = vmatpush2.msra.mxu0 0.0
    %419 = vmatprep.subr.mxu0 0.0
    %420 = vmatpush2.msra.mxu0 0.0
    %421 = vmatprep.mubr.f32.mxu0 0.0
    %422 = vmatmul.mubr.f32.gmra.mxu0 %v77
    %v423 = vpop.f32.mrf.mxu0
    %v424 = vadd.f32 0.0, %v423
    %v425 = vpop.f32.mrf.mxu0
    %426 = vmatprep.mubr.f32.mxu0 0.0
    %427 = vmatmul.mubr.f32.gmra.mxu0 %v80
    %v428 = vpop.f32.mrf.mxu0
    %v429 = vadd.f32 0.0, %v428
    %v430 = vpop.f32.mrf.mxu0
    %431 = vmatprep.mubr.f32.mxu0 0.0
    %432 = vmatmul.mubr.f32.gmra.mxu0 %v83
    %v433 = vpop.f32.mrf.mxu0
    %v434 = vadd.f32 0.0, %v433
    %v435 = vpop.f32.mrf.mxu0
    %436 = vmatprep.mubr.f32.mxu0 0.0
    %437 = vmatmul.mubr.f32.gmra.mxu0 %v86
    %v438 = vpop.f32.mrf.mxu0
    %v439 = vadd.f32 0.0, %v438
    %v440 = vpop.f32.mrf.mxu0
    %441 = vmatprep.mubr.f32.mxu0 0.0
    %442 = vmatmul.mubr.f32.gmra.mxu0 %v89
    %v443 = vpop.f32.mrf.mxu0
    %v444 = vadd.f32 0.0, %v443
    %v445 = vpop.f32.mrf.mxu0
    %446 = vmatprep.mubr.f32.mxu0 0.0
    %447 = vmatmul.mubr.f32.gmra.mxu0 %v92
    %v448 = vpop.f32.mrf.mxu0
    %v449 = vadd.f32 0.0, %v448
    %v450 = vpop.f32.mrf.mxu0
    %451 = vmatprep.mubr.f32.mxu0 0.0
    %452 = vmatmul.mubr.f32.gmra.mxu0 %v95
    %v453 = vpop.f32.mrf.mxu0
    %v454 = vadd.f32 0.0, %v453
    %v455 = vpop.f32.mrf.mxu0
    %456 = vmatprep.mubr.f32.mxu0 0.0
    %457 = vmatmul.mubr.f32.gmra.mxu0 %v98
    %v458 = vpop.f32.mrf.mxu0
    %v459 = vadd.f32 0.0, %v458
    %v460 = vpop.f32.mrf.mxu0
    %461 = vdwg.mxu0
    %s462 = scalar_lea.vmem [#allocation7], 256
    %v463 = vld [vmem:[%s462] sm:$0xff]
    %v464 = vld [vmem:[%s462 + $0x8] sm:$0xff]
    %v465 = vld [vmem:[%s462 + $0x10] sm:$0xff]
    %v466 = vld [vmem:[%s462 + $0x18] sm:$0xff]
    %v467 = vld [vmem:[%s462 + $0x20] sm:$0xff]
    %v468 = vld [vmem:[%s462 + $0x28] sm:$0xff]
    %v469 = vld [vmem:[%s462 + $0x30] sm:$0xff]
    %v470 = vld [vmem:[%s462 + $0x38] sm:$0xff]
    %v471 = vld [vmem:[%s462 + $0x40] sm:$0xff]
    %v472 = vld [vmem:[%s462 + $0x48] sm:$0xff]
    %v473 = vld [vmem:[%s462 + $0x50] sm:$0xff]
    %v474 = vld [vmem:[%s462 + $0x58] sm:$0xff]
    %v475 = vld [vmem:[%s462 + $0x60] sm:$0xff]
    %v476 = vld [vmem:[%s462 + $0x68] sm:$0xff]
    %v477 = vld [vmem:[%s462 + $0x70] sm:$0xff]
    %v478 = vld [vmem:[%s462 + $0x78] sm:$0xff]
    %v479 = vld [vmem:[%s462 + $0x80] sm:$0xff]
    %v480 = vld [vmem:[%s462 + $0x88] sm:$0xff]
    %v481 = vld [vmem:[%s462 + $0x90] sm:$0xff]
    %v482 = vld [vmem:[%s462 + $0x98] sm:$0xff]
    %v483 = vld [vmem:[%s462 + $0xa0] sm:$0xff]
    %v484 = vld [vmem:[%s462 + $0xa8] sm:$0xff]
    %v485 = vld [vmem:[%s462 + $0xb0] sm:$0xff]
    %v486 = vld [vmem:[%s462 + $0xb8] sm:$0xff]
    %v487 = vld [vmem:[%s462 + $0xc0] sm:$0xff]
    %v488 = vld [vmem:[%s462 + $0xc8] sm:$0xff]
    %v489 = vld [vmem:[%s462 + $0xd0] sm:$0xff]
    %v490 = vld [vmem:[%s462 + $0xd8] sm:$0xff]
    %v491 = vld [vmem:[%s462 + $0xe0] sm:$0xff]
    %v492 = vld [vmem:[%s462 + $0xe8] sm:$0xff]
    %v493 = vld [vmem:[%s462 + $0xf0] sm:$0xff]
    %v494 = vld [vmem:[%s462 + $0xf8] sm:$0xff]
    %s495 = scalar_lea.vmem %s3, 1
    %v496 = vld [vmem:[%s495] sm:$0x1]
    %v498 = vlaneseq
    %v499 = vshrl.u32 %v498, 7
    %v500 = vsub.s32 0, %v499
    %v501 = vrot.slane %v496, %v500
    %503 = vmatprep.subr.mxu0 0.0
    %504 = vmatpush1.msra.mxu0 %v478
    %505 = vmatprep.subr.mxu0 0.0
    %506 = vmatpush1.msra.mxu0 %v477
    %507 = vmatprep.subr.mxu0 0.0
    %508 = vmatpush1.msra.mxu0 %v476
    %509 = vmatprep.subr.mxu0 0.0
    %510 = vmatpush1.msra.mxu0 %v475
    %511 = vmatprep.subr.mxu0 0.0
    %512 = vmatpush1.msra.mxu0 %v474
    %513 = vmatprep.subr.mxu0 0.0
    %514 = vmatpush1.msra.mxu0 %v473
    %515 = vmatprep.subr.mxu0 0.0
    %516 = vmatpush1.msra.mxu0 %v472
    %517 = vmatprep.subr.mxu0 0.0
    %518 = vmatpush1.msra.mxu0 %v471
    %519 = vmatprep.subr.mxu0 0.0
    %520 = vmatpush1.msra.mxu0 %v470
    %521 = vmatprep.subr.mxu0 0.0
    %522 = vmatpush1.msra.mxu0 %v469
    %523 = vmatprep.subr.mxu0 0.0
    %524 = vmatpush1.msra.mxu0 %v468
    %525 = vmatprep.subr.mxu0 0.0
    %526 = vmatpush1.msra.mxu0 %v467
    %527 = vmatprep.subr.mxu0 0.0
    %528 = vmatpush1.msra.mxu0 %v466
    %529 = vmatprep.subr.mxu0 0.0
    %530 = vmatpush1.msra.mxu0 %v465
    %531 = vmatprep.subr.mxu0 0.0
    %532 = vmatpush1.msra.mxu0 %v464
    %533 = vmatprep.subr.mxu0 0.0
    %534 = vmatpush1.msra.mxu0 %v463
    %535 = vmatprep.subr.mxu0 0.0
    %536 = vmatpush2.msra.mxu0 %v494
    %537 = vmatprep.subr.mxu0 0.0
    %538 = vmatpush2.msra.mxu0 %v493
    %539 = vmatprep.subr.mxu0 0.0
    %540 = vmatpush2.msra.mxu0 %v492
    %541 = vmatprep.subr.mxu0 0.0
    %542 = vmatpush2.msra.mxu0 %v491
    %543 = vmatprep.subr.mxu0 0.0
    %544 = vmatpush2.msra.mxu0 %v490
    %545 = vmatprep.subr.mxu0 0.0
    %546 = vmatpush2.msra.mxu0 %v489
    %547 = vmatprep.subr.mxu0 0.0
    %548 = vmatpush2.msra.mxu0 %v488
    %549 = vmatprep.subr.mxu0 0.0
    %550 = vmatpush2.msra.mxu0 %v487
    %551 = vmatprep.subr.mxu0 0.0
    %552 = vmatpush2.msra.mxu0 %v486
    %553 = vmatprep.subr.mxu0 0.0
    %554 = vmatpush2.msra.mxu0 %v485
    %555 = vmatprep.subr.mxu0 0.0
    %556 = vmatpush2.msra.mxu0 %v484
    %557 = vmatprep.subr.mxu0 0.0
    %558 = vmatpush2.msra.mxu0 %v483
    %559 = vmatprep.subr.mxu0 0.0
    %560 = vmatpush2.msra.mxu0 %v482
    %561 = vmatprep.subr.mxu0 0.0
    %562 = vmatpush2.msra.mxu0 %v481
    %563 = vmatprep.subr.mxu0 0.0
    %564 = vmatpush2.msra.mxu0 %v480
    %565 = vmatprep.subr.mxu0 0.0
    %566 = vmatpush2.msra.mxu0 %v479
    %567 = vmatprep.mubr.f32.mxu0 %v424
    %568 = vmatmul.mubr.f32.gmra.mxu0 %v349
    %v569 = vpop.f32.mrf.mxu0
    %v570 = vadd.f32 %v501, %v569
    %v571 = vpop.f32.mrf.mxu0
    %572 = vmatprep.mubr.f32.mxu0 %v429
    %573 = vmatmul.mubr.f32.gmra.mxu0 %v350
    %v574 = vpop.f32.mrf.mxu0
    %v575 = vadd.f32 %v501, %v574
    %v576 = vpop.f32.mrf.mxu0
    %577 = vmatprep.mubr.f32.mxu0 %v434
    %578 = vmatmul.mubr.f32.gmra.mxu0 %v351
    %v579 = vpop.f32.mrf.mxu0
    %v580 = vadd.f32 %v501, %v579
    %v581 = vpop.f32.mrf.mxu0
    %582 = vmatprep.mubr.f32.mxu0 %v439
    %583 = vmatmul.mubr.f32.gmra.mxu0 %v352
    %v584 = vpop.f32.mrf.mxu0
    %v585 = vadd.f32 %v501, %v584
    %v586 = vpop.f32.mrf.mxu0
    %587 = vmatprep.mubr.f32.mxu0 %v444
    %588 = vmatmul.mubr.f32.gmra.mxu0 %v353
    %v589 = vpop.f32.mrf.mxu0
    %v590 = vadd.f32 %v501, %v589
    %v591 = vpop.f32.mrf.mxu0
    %592 = vmatprep.mubr.f32.mxu0 %v449
    %593 = vmatmul.mubr.f32.gmra.mxu0 %v354
    %v594 = vpop.f32.mrf.mxu0
    %v595 = vadd.f32 %v501, %v594
    %v596 = vpop.f32.mrf.mxu0
    %597 = vmatprep.mubr.f32.mxu0 %v454
    %598 = vmatmul.mubr.f32.gmra.mxu0 %v355
    %v599 = vpop.f32.mrf.mxu0
    %v600 = vadd.f32 %v501, %v599
    %v601 = vpop.f32.mrf.mxu0
    %602 = vmatprep.mubr.f32.mxu0 %v459
    %603 = vmatmul.mubr.f32.gmra.mxu0 %v356
    %v604 = vpop.f32.mrf.mxu0
    %v605 = vadd.f32 %v501, %v604
    %v606 = vpop.f32.mrf.mxu0
    %607 = vdwg.mxu0
    %v608 = vmax.f32 %v570, 0.0
    %v609 = vmax.f32 %v575, 0.0
    %v610 = vmax.f32 %v580, 0.0
    %v611 = vmax.f32 %v585, 0.0
    %v612 = vmax.f32 %v590, 0.0
    %v613 = vmax.f32 %v595, 0.0
    %v614 = vmax.f32 %v600, 0.0
    %v615 = vmax.f32 %v605, 0.0
    %616 = vmatprep.subr.mxu0 0.0
    %617 = vmatpush1.msra.mxu0 0.0
    %618 = vmatprep.subr.mxu0 0.0
    %619 = vmatpush1.msra.mxu0 0.0
    %620 = vmatprep.subr.mxu0 0.0
    %621 = vmatpush1.msra.mxu0 0.0
    %622 = vmatprep.subr.mxu0 0.0
    %623 = vmatpush1.msra.mxu0 0.0
    %624 = vmatprep.subr.mxu0 0.0
    %625 = vmatpush1.msra.mxu0 0.0
    %626 = vmatprep.subr.mxu0 0.0
    %627 = vmatpush1.msra.mxu0 0.0
    %628 = vmatprep.subr.mxu0 0.0
    %629 = vmatpush1.msra.mxu0 0.0
    %630 = vmatprep.subr.mxu0 0.0
    %631 = vmatpush1.msra.mxu0 0.0
    %632 = vmatprep.subr.mxu0 0.0
    %633 = vmatpush1.msra.mxu0 %v615
    %634 = vmatprep.subr.mxu0 0.0
    %635 = vmatpush1.msra.mxu0 %v614
    %636 = vmatprep.subr.mxu0 0.0
    %637 = vmatpush1.msra.mxu0 %v613
    %638 = vmatprep.subr.mxu0 0.0
    %639 = vmatpush1.msra.mxu0 %v612
    %640 = vmatprep.subr.mxu0 0.0
    %641 = vmatpush1.msra.mxu0 %v611
    %642 = vmatprep.subr.mxu0 0.0
    %643 = vmatpush1.msra.mxu0 %v610
    %644 = vmatprep.subr.mxu0 0.0
    %645 = vmatpush1.msra.mxu0 %v609
    %646 = vmatprep.subr.mxu0 0.0
    %647 = vmatpush1.msra.mxu0 %v608
    %648 = vmatprep.subr.mxu0 0.0
    %649 = vmatpush2.msra.mxu0 0.0
    %650 = vmatprep.subr.mxu0 0.0
    %651 = vmatpush2.msra.mxu0 0.0
    %652 = vmatprep.subr.mxu0 0.0
    %653 = vmatpush2.msra.mxu0 0.0
    %654 = vmatprep.subr.mxu0 0.0
    %655 = vmatpush2.msra.mxu0 0.0
    %656 = vmatprep.subr.mxu0 0.0
    %657 = vmatpush2.msra.mxu0 0.0
    %658 = vmatprep.subr.mxu0 0.0
    %659 = vmatpush2.msra.mxu0 0.0
    %660 = vmatprep.subr.mxu0 0.0
    %661 = vmatpush2.msra.mxu0 0.0
    %662 = vmatprep.subr.mxu0 0.0
    %663 = vmatpush2.msra.mxu0 0.0
    %664 = vmatprep.subr.mxu0 0.0
    %665 = vmatpush2.msra.mxu0 0.0
    %666 = vmatprep.subr.mxu0 0.0
    %667 = vmatpush2.msra.mxu0 0.0
    %668 = vmatprep.subr.mxu0 0.0
    %669 = vmatpush2.msra.mxu0 0.0
    %670 = vmatprep.subr.mxu0 0.0
    %671 = vmatpush2.msra.mxu0 0.0
    %672 = vmatprep.subr.mxu0 0.0
    %673 = vmatpush2.msra.mxu0 0.0
    %674 = vmatprep.subr.mxu0 0.0
    %675 = vmatpush2.msra.mxu0 0.0
    %676 = vmatprep.subr.mxu0 0.0
    %677 = vmatpush2.msra.mxu0 0.0
    %678 = vmatprep.subr.mxu0 0.0
    %679 = vmatpush2.msra.mxu0 0.0
    %680 = vmatprep.mubr.f32.mxu0 0.0
    %681 = vmatmul.mubr.f32.gmra.mxu0 %v77
    %v682 = vpop.f32.mrf.mxu0
    %v683 = vadd.f32 0.0, %v682
    %v684 = vpop.f32.mrf.mxu0
    %685 = vmatprep.mubr.f32.mxu0 0.0
    %686 = vmatmul.mubr.f32.gmra.mxu0 %v80
    %v687 = vpop.f32.mrf.mxu0
    %v688 = vadd.f32 0.0, %v687
    %v689 = vpop.f32.mrf.mxu0
    %690 = vmatprep.mubr.f32.mxu0 0.0
    %691 = vmatmul.mubr.f32.gmra.mxu0 %v83
    %v692 = vpop.f32.mrf.mxu0
    %v693 = vadd.f32 0.0, %v692
    %v694 = vpop.f32.mrf.mxu0
    %695 = vmatprep.mubr.f32.mxu0 0.0
    %696 = vmatmul.mubr.f32.gmra.mxu0 %v86
    %v697 = vpop.f32.mrf.mxu0
    %v698 = vadd.f32 0.0, %v697
    %v699 = vpop.f32.mrf.mxu0
    %700 = vmatprep.mubr.f32.mxu0 0.0
    %701 = vmatmul.mubr.f32.gmra.mxu0 %v89
    %v702 = vpop.f32.mrf.mxu0
    %v703 = vadd.f32 0.0, %v702
    %v704 = vpop.f32.mrf.mxu0
    %705 = vmatprep.mubr.f32.mxu0 0.0
    %706 = vmatmul.mubr.f32.gmra.mxu0 %v92
    %v707 = vpop.f32.mrf.mxu0
    %v708 = vadd.f32 0.0, %v707
    %v709 = vpop.f32.mrf.mxu0
    %710 = vmatprep.mubr.f32.mxu0 0.0
    %711 = vmatmul.mubr.f32.gmra.mxu0 %v95
    %v712 = vpop.f32.mrf.mxu0
    %v713 = vadd.f32 0.0, %v712
    %v714 = vpop.f32.mrf.mxu0
    %715 = vmatprep.mubr.f32.mxu0 0.0
    %716 = vmatmul.mubr.f32.gmra.mxu0 %v98
    %v717 = vpop.f32.mrf.mxu0
    %v718 = vadd.f32 0.0, %v717
    %v719 = vpop.f32.mrf.mxu0
    %720 = vdwg.mxu0
    %s721 = scalar_lea.vmem [#allocation7], 512
    %v722 = vld [vmem:[%s721] sm:$0xff]
    %v723 = vld [vmem:[%s721 + $0x8] sm:$0xff]
    %v724 = vld [vmem:[%s721 + $0x10] sm:$0xff]
    %v725 = vld [vmem:[%s721 + $0x18] sm:$0xff]
    %v726 = vld [vmem:[%s721 + $0x20] sm:$0xff]
    %v727 = vld [vmem:[%s721 + $0x28] sm:$0xff]
    %v728 = vld [vmem:[%s721 + $0x30] sm:$0xff]
    %v729 = vld [vmem:[%s721 + $0x38] sm:$0xff]
    %v730 = vld [vmem:[%s721 + $0x40] sm:$0xff]
    %v731 = vld [vmem:[%s721 + $0x48] sm:$0xff]
    %v732 = vld [vmem:[%s721 + $0x50] sm:$0xff]
    %v733 = vld [vmem:[%s721 + $0x58] sm:$0xff]
    %v734 = vld [vmem:[%s721 + $0x60] sm:$0xff]
    %v735 = vld [vmem:[%s721 + $0x68] sm:$0xff]
    %v736 = vld [vmem:[%s721 + $0x70] sm:$0xff]
    %v737 = vld [vmem:[%s721 + $0x78] sm:$0xff]
    %v738 = vld [vmem:[%s721 + $0x80] sm:$0xff]
    %v739 = vld [vmem:[%s721 + $0x88] sm:$0xff]
    %v740 = vld [vmem:[%s721 + $0x90] sm:$0xff]
    %v741 = vld [vmem:[%s721 + $0x98] sm:$0xff]
    %v742 = vld [vmem:[%s721 + $0xa0] sm:$0xff]
    %v743 = vld [vmem:[%s721 + $0xa8] sm:$0xff]
    %v744 = vld [vmem:[%s721 + $0xb0] sm:$0xff]
    %v745 = vld [vmem:[%s721 + $0xb8] sm:$0xff]
    %v746 = vld [vmem:[%s721 + $0xc0] sm:$0xff]
    %v747 = vld [vmem:[%s721 + $0xc8] sm:$0xff]
    %v748 = vld [vmem:[%s721 + $0xd0] sm:$0xff]
    %v749 = vld [vmem:[%s721 + $0xd8] sm:$0xff]
    %v750 = vld [vmem:[%s721 + $0xe0] sm:$0xff]
    %v751 = vld [vmem:[%s721 + $0xe8] sm:$0xff]
    %v752 = vld [vmem:[%s721 + $0xf0] sm:$0xff]
    %v753 = vld [vmem:[%s721 + $0xf8] sm:$0xff]
    %s754 = scalar_lea.vmem %s3, 2
    %v755 = vld [vmem:[%s754] sm:$0x1]
    %v757 = vlaneseq
    %v758 = vshrl.u32 %v757, 7
    %v759 = vsub.s32 0, %v758
    %v760 = vrot.slane %v755, %v759
    %762 = vmatprep.subr.mxu0 0.0
    %763 = vmatpush1.msra.mxu0 %v737
    %764 = vmatprep.subr.mxu0 0.0
    %765 = vmatpush1.msra.mxu0 %v736
    %766 = vmatprep.subr.mxu0 0.0
    %767 = vmatpush1.msra.mxu0 %v735
    %768 = vmatprep.subr.mxu0 0.0
    %769 = vmatpush1.msra.mxu0 %v734
    %770 = vmatprep.subr.mxu0 0.0
    %771 = vmatpush1.msra.mxu0 %v733
    %772 = vmatprep.subr.mxu0 0.0
    %773 = vmatpush1.msra.mxu0 %v732
    %774 = vmatprep.subr.mxu0 0.0
    %775 = vmatpush1.msra.mxu0 %v731
    %776 = vmatprep.subr.mxu0 0.0
    %777 = vmatpush1.msra.mxu0 %v730
    %778 = vmatprep.subr.mxu0 0.0
    %779 = vmatpush1.msra.mxu0 %v729
    %780 = vmatprep.subr.mxu0 0.0
    %781 = vmatpush1.msra.mxu0 %v728
    %782 = vmatprep.subr.mxu0 0.0
    %783 = vmatpush1.msra.mxu0 %v727
    %784 = vmatprep.subr.mxu0 0.0
    %785 = vmatpush1.msra.mxu0 %v726
    %786 = vmatprep.subr.mxu0 0.0
    %787 = vmatpush1.msra.mxu0 %v725
    %788 = vmatprep.subr.mxu0 0.0
    %789 = vmatpush1.msra.mxu0 %v724
    %790 = vmatprep.subr.mxu0 0.0
    %791 = vmatpush1.msra.mxu0 %v723
    %792 = vmatprep.subr.mxu0 0.0
    %793 = vmatpush1.msra.mxu0 %v722
    %794 = vmatprep.subr.mxu0 0.0
    %795 = vmatpush2.msra.mxu0 %v753
    %796 = vmatprep.subr.mxu0 0.0
    %797 = vmatpush2.msra.mxu0 %v752
    %798 = vmatprep.subr.mxu0 0.0
    %799 = vmatpush2.msra.mxu0 %v751
    %800 = vmatprep.subr.mxu0 0.0
    %801 = vmatpush2.msra.mxu0 %v750
    %802 = vmatprep.subr.mxu0 0.0
    %803 = vmatpush2.msra.mxu0 %v749
    %804 = vmatprep.subr.mxu0 0.0
    %805 = vmatpush2.msra.mxu0 %v748
    %806 = vmatprep.subr.mxu0 0.0
    %807 = vmatpush2.msra.mxu0 %v747
    %808 = vmatprep.subr.mxu0 0.0
    %809 = vmatpush2.msra.mxu0 %v746
    %810 = vmatprep.subr.mxu0 0.0
    %811 = vmatpush2.msra.mxu0 %v745
    %812 = vmatprep.subr.mxu0 0.0
    %813 = vmatpush2.msra.mxu0 %v744
    %814 = vmatprep.subr.mxu0 0.0
    %815 = vmatpush2.msra.mxu0 %v743
    %816 = vmatprep.subr.mxu0 0.0
    %817 = vmatpush2.msra.mxu0 %v742
    %818 = vmatprep.subr.mxu0 0.0
    %819 = vmatpush2.msra.mxu0 %v741
    %820 = vmatprep.subr.mxu0 0.0
    %821 = vmatpush2.msra.mxu0 %v740
    %822 = vmatprep.subr.mxu0 0.0
    %823 = vmatpush2.msra.mxu0 %v739
    %824 = vmatprep.subr.mxu0 0.0
    %825 = vmatpush2.msra.mxu0 %v738
    %826 = vmatprep.mubr.f32.mxu0 %v683
    %827 = vmatmul.mubr.f32.gmra.mxu0 %v608
    %v828 = vpop.f32.mrf.mxu0
    %v829 = vadd.f32 %v760, %v828
    %v830 = vpop.f32.mrf.mxu0
    %831 = vmatprep.mubr.f32.mxu0 %v688
    %832 = vmatmul.mubr.f32.gmra.mxu0 %v609
    %v833 = vpop.f32.mrf.mxu0
    %v834 = vadd.f32 %v760, %v833
    %v835 = vpop.f32.mrf.mxu0
    %836 = vmatprep.mubr.f32.mxu0 %v693
    %837 = vmatmul.mubr.f32.gmra.mxu0 %v610
    %v838 = vpop.f32.mrf.mxu0
    %v839 = vadd.f32 %v760, %v838
    %v840 = vpop.f32.mrf.mxu0
    %841 = vmatprep.mubr.f32.mxu0 %v698
    %842 = vmatmul.mubr.f32.gmra.mxu0 %v611
    %v843 = vpop.f32.mrf.mxu0
    %v844 = vadd.f32 %v760, %v843
    %v845 = vpop.f32.mrf.mxu0
    %846 = vmatprep.mubr.f32.mxu0 %v703
    %847 = vmatmul.mubr.f32.gmra.mxu0 %v612
    %v848 = vpop.f32.mrf.mxu0
    %v849 = vadd.f32 %v760, %v848
    %v850 = vpop.f32.mrf.mxu0
    %851 = vmatprep.mubr.f32.mxu0 %v708
    %852 = vmatmul.mubr.f32.gmra.mxu0 %v613
    %v853 = vpop.f32.mrf.mxu0
    %v854 = vadd.f32 %v760, %v853
    %v855 = vpop.f32.mrf.mxu0
    %856 = vmatprep.mubr.f32.mxu0 %v713
    %857 = vmatmul.mubr.f32.gmra.mxu0 %v614
    %v858 = vpop.f32.mrf.mxu0
    %v859 = vadd.f32 %v760, %v858
    %v860 = vpop.f32.mrf.mxu0
    %861 = vmatprep.mubr.f32.mxu0 %v718
    %862 = vmatmul.mubr.f32.gmra.mxu0 %v615
    %v863 = vpop.f32.mrf.mxu0
    %v864 = vadd.f32 %v760, %v863
    %v865 = vpop.f32.mrf.mxu0
    %866 = vdwg.mxu0
    %v867 = vmax.f32 %v829, 0.0
    %v868 = vmax.f32 %v834, 0.0
    %v869 = vmax.f32 %v839, 0.0
    %v870 = vmax.f32 %v844, 0.0
    %v871 = vmax.f32 %v849, 0.0
    %v872 = vmax.f32 %v854, 0.0
    %v873 = vmax.f32 %v859, 0.0
    %v874 = vmax.f32 %v864, 0.0
    %875 = vmatprep.subr.mxu0 0.0
    %876 = vmatpush1.msra.mxu0 0.0
    %877 = vmatprep.subr.mxu0 0.0
    %878 = vmatpush1.msra.mxu0 0.0
    %879 = vmatprep.subr.mxu0 0.0
    %880 = vmatpush1.msra.mxu0 0.0
    %881 = vmatprep.subr.mxu0 0.0
    %882 = vmatpush1.msra.mxu0 0.0
    %883 = vmatprep.subr.mxu0 0.0
    %884 = vmatpush1.msra.mxu0 0.0
    %885 = vmatprep.subr.mxu0 0.0
    %886 = vmatpush1.msra.mxu0 0.0
    %887 = vmatprep.subr.mxu0 0.0
    %888 = vmatpush1.msra.mxu0 0.0
    %889 = vmatprep.subr.mxu0 0.0
    %890 = vmatpush1.msra.mxu0 0.0
    %891 = vmatprep.subr.mxu0 0.0
    %892 = vmatpush1.msra.mxu0 %v874
    %893 = vmatprep.subr.mxu0 0.0
    %894 = vmatpush1.msra.mxu0 %v873
    %895 = vmatprep.subr.mxu0 0.0
    %896 = vmatpush1.msra.mxu0 %v872
    %897 = vmatprep.subr.mxu0 0.0
    %898 = vmatpush1.msra.mxu0 %v871
    %899 = vmatprep.subr.mxu0 0.0
    %900 = vmatpush1.msra.mxu0 %v870
    %901 = vmatprep.subr.mxu0 0.0
    %902 = vmatpush1.msra.mxu0 %v869
    %903 = vmatprep.subr.mxu0 0.0
    %904 = vmatpush1.msra.mxu0 %v868
    %905 = vmatprep.subr.mxu0 0.0
    %906 = vmatpush1.msra.mxu0 %v867
    %907 = vmatprep.subr.mxu0 0.0
    %908 = vmatpush2.msra.mxu0 0.0
    %909 = vmatprep.subr.mxu0 0.0
    %910 = vmatpush2.msra.mxu0 0.0
    %911 = vmatprep.subr.mxu0 0.0
    %912 = vmatpush2.msra.mxu0 0.0
    %913 = vmatprep.subr.mxu0 0.0
    %914 = vmatpush2.msra.mxu0 0.0
    %915 = vmatprep.subr.mxu0 0.0
    %916 = vmatpush2.msra.mxu0 0.0
    %917 = vmatprep.subr.mxu0 0.0
    %918 = vmatpush2.msra.mxu0 0.0
    %919 = vmatprep.subr.mxu0 0.0
    %920 = vmatpush2.msra.mxu0 0.0
    %921 = vmatprep.subr.mxu0 0.0
    %922 = vmatpush2.msra.mxu0 0.0
    %923 = vmatprep.subr.mxu0 0.0
    %924 = vmatpush2.msra.mxu0 0.0
    %925 = vmatprep.subr.mxu0 0.0
    %926 = vmatpush2.msra.mxu0 0.0
    %927 = vmatprep.subr.mxu0 0.0
    %928 = vmatpush2.msra.mxu0 0.0
    %929 = vmatprep.subr.mxu0 0.0
    %930 = vmatpush2.msra.mxu0 0.0
    %931 = vmatprep.subr.mxu0 0.0
    %932 = vmatpush2.msra.mxu0 0.0
    %933 = vmatprep.subr.mxu0 0.0
    %934 = vmatpush2.msra.mxu0 0.0
    %935 = vmatprep.subr.mxu0 0.0
    %936 = vmatpush2.msra.mxu0 0.0
    %937 = vmatprep.subr.mxu0 0.0
    %938 = vmatpush2.msra.mxu0 0.0
    %939 = vmatprep.mubr.f32.mxu0 0.0
    %940 = vmatmul.mubr.f32.gmra.mxu0 %v77
    %v941 = vpop.f32.mrf.mxu0
    %v942 = vadd.f32 0.0, %v941
    %v943 = vpop.f32.mrf.mxu0
    %944 = vmatprep.mubr.f32.mxu0 0.0
    %945 = vmatmul.mubr.f32.gmra.mxu0 %v80
    %v946 = vpop.f32.mrf.mxu0
    %v947 = vadd.f32 0.0, %v946
    %v948 = vpop.f32.mrf.mxu0
    %949 = vmatprep.mubr.f32.mxu0 0.0
    %950 = vmatmul.mubr.f32.gmra.mxu0 %v83
    %v951 = vpop.f32.mrf.mxu0
    %v952 = vadd.f32 0.0, %v951
    %v953 = vpop.f32.mrf.mxu0
    %954 = vmatprep.mubr.f32.mxu0 0.0
    %955 = vmatmul.mubr.f32.gmra.mxu0 %v86
    %v956 = vpop.f32.mrf.mxu0
    %v957 = vadd.f32 0.0, %v956
    %v958 = vpop.f32.mrf.mxu0
    %959 = vmatprep.mubr.f32.mxu0 0.0
    %960 = vmatmul.mubr.f32.gmra.mxu0 %v89
    %v961 = vpop.f32.mrf.mxu0
    %v962 = vadd.f32 0.0, %v961
    %v963 = vpop.f32.mrf.mxu0
    %964 = vmatprep.mubr.f32.mxu0 0.0
    %965 = vmatmul.mubr.f32.gmra.mxu0 %v92
    %v966 = vpop.f32.mrf.mxu0
    %v967 = vadd.f32 0.0, %v966
    %v968 = vpop.f32.mrf.mxu0
    %969 = vmatprep.mubr.f32.mxu0 0.0
    %970 = vmatmul.mubr.f32.gmra.mxu0 %v95
    %v971 = vpop.f32.mrf.mxu0
    %v972 = vadd.f32 0.0, %v971
    %v973 = vpop.f32.mrf.mxu0
    %974 = vmatprep.mubr.f32.mxu0 0.0
    %975 = vmatmul.mubr.f32.gmra.mxu0 %v98
    %v976 = vpop.f32.mrf.mxu0
    %v977 = vadd.f32 0.0, %v976
    %v978 = vpop.f32.mrf.mxu0
    %979 = vdwg.mxu0
    %s980 = scalar_lea.vmem [#allocation7], 768
    %v981 = vld [vmem:[%s980] sm:$0xff]
    %v982 = vld [vmem:[%s980 + $0x8] sm:$0xff]
    %v983 = vld [vmem:[%s980 + $0x10] sm:$0xff]
    %v984 = vld [vmem:[%s980 + $0x18] sm:$0xff]
    %v985 = vld [vmem:[%s980 + $0x20] sm:$0xff]
    %v986 = vld [vmem:[%s980 + $0x28] sm:$0xff]
    %v987 = vld [vmem:[%s980 + $0x30] sm:$0xff]
    %v988 = vld [vmem:[%s980 + $0x38] sm:$0xff]
    %v989 = vld [vmem:[%s980 + $0x40] sm:$0xff]
    %v990 = vld [vmem:[%s980 + $0x48] sm:$0xff]
    %v991 = vld [vmem:[%s980 + $0x50] sm:$0xff]
    %v992 = vld [vmem:[%s980 + $0x58] sm:$0xff]
    %v993 = vld [vmem:[%s980 + $0x60] sm:$0xff]
    %v994 = vld [vmem:[%s980 + $0x68] sm:$0xff]
    %v995 = vld [vmem:[%s980 + $0x70] sm:$0xff]
    %v996 = vld [vmem:[%s980 + $0x78] sm:$0xff]
    %v997 = vld [vmem:[%s980 + $0x80] sm:$0xff]
    %v998 = vld [vmem:[%s980 + $0x88] sm:$0xff]
    %v999 = vld [vmem:[%s980 + $0x90] sm:$0xff]
    %v1000 = vld [vmem:[%s980 + $0x98] sm:$0xff]
    %v1001 = vld [vmem:[%s980 + $0xa0] sm:$0xff]
    %v1002 = vld [vmem:[%s980 + $0xa8] sm:$0xff]
    %v1003 = vld [vmem:[%s980 + $0xb0] sm:$0xff]
    %v1004 = vld [vmem:[%s980 + $0xb8] sm:$0xff]
    %v1005 = vld [vmem:[%s980 + $0xc0] sm:$0xff]
    %v1006 = vld [vmem:[%s980 + $0xc8] sm:$0xff]
    %v1007 = vld [vmem:[%s980 + $0xd0] sm:$0xff]
    %v1008 = vld [vmem:[%s980 + $0xd8] sm:$0xff]
    %v1009 = vld [vmem:[%s980 + $0xe0] sm:$0xff]
    %v1010 = vld [vmem:[%s980 + $0xe8] sm:$0xff]
    %v1011 = vld [vmem:[%s980 + $0xf0] sm:$0xff]
    %v1012 = vld [vmem:[%s980 + $0xf8] sm:$0xff]
    %s1013 = scalar_lea.vmem %s3, 3
    %v1014 = vld [vmem:[%s1013] sm:$0x1]
    %v1016 = vlaneseq
    %v1017 = vshrl.u32 %v1016, 7
    %v1018 = vsub.s32 0, %v1017
    %v1019 = vrot.slane %v1014, %v1018
    %1021 = vmatprep.subr.mxu0 0.0
    %1022 = vmatpush1.msra.mxu0 %v996
    %1023 = vmatprep.subr.mxu0 0.0
    %1024 = vmatpush1.msra.mxu0 %v995
    %1025 = vmatprep.subr.mxu0 0.0
    %1026 = vmatpush1.msra.mxu0 %v994
    %1027 = vmatprep.subr.mxu0 0.0
    %1028 = vmatpush1.msra.mxu0 %v993
    %1029 = vmatprep.subr.mxu0 0.0
    %1030 = vmatpush1.msra.mxu0 %v992
    %1031 = vmatprep.subr.mxu0 0.0
    %1032 = vmatpush1.msra.mxu0 %v991
    %1033 = vmatprep.subr.mxu0 0.0
    %1034 = vmatpush1.msra.mxu0 %v990
    %1035 = vmatprep.subr.mxu0 0.0
    %1036 = vmatpush1.msra.mxu0 %v989
    %1037 = vmatprep.subr.mxu0 0.0
    %1038 = vmatpush1.msra.mxu0 %v988
    %1039 = vmatprep.subr.mxu0 0.0
    %1040 = vmatpush1.msra.mxu0 %v987
    %1041 = vmatprep.subr.mxu0 0.0
    %1042 = vmatpush1.msra.mxu0 %v986
    %1043 = vmatprep.subr.mxu0 0.0
    %1044 = vmatpush1.msra.mxu0 %v985
    %1045 = vmatprep.subr.mxu0 0.0
    %1046 = vmatpush1.msra.mxu0 %v984
    %1047 = vmatprep.subr.mxu0 0.0
    %1048 = vmatpush1.msra.mxu0 %v983
    %1049 = vmatprep.subr.mxu0 0.0
    %1050 = vmatpush1.msra.mxu0 %v982
    %1051 = vmatprep.subr.mxu0 0.0
    %1052 = vmatpush1.msra.mxu0 %v981
    %1053 = vmatprep.subr.mxu0 0.0
    %1054 = vmatpush2.msra.mxu0 %v1012
    %1055 = vmatprep.subr.mxu0 0.0
    %1056 = vmatpush2.msra.mxu0 %v1011
    %1057 = vmatprep.subr.mxu0 0.0
    %1058 = vmatpush2.msra.mxu0 %v1010
    %1059 = vmatprep.subr.mxu0 0.0
    %1060 = vmatpush2.msra.mxu0 %v1009
    %1061 = vmatprep.subr.mxu0 0.0
    %1062 = vmatpush2.msra.mxu0 %v1008
    %1063 = vmatprep.subr.mxu0 0.0
    %1064 = vmatpush2.msra.mxu0 %v1007
    %1065 = vmatprep.subr.mxu0 0.0
    %1066 = vmatpush2.msra.mxu0 %v1006
    %1067 = vmatprep.subr.mxu0 0.0
    %1068 = vmatpush2.msra.mxu0 %v1005
    %1069 = vmatprep.subr.mxu0 0.0
    %1070 = vmatpush2.msra.mxu0 %v1004
    %1071 = vmatprep.subr.mxu0 0.0
    %1072 = vmatpush2.msra.mxu0 %v1003
    %1073 = vmatprep.subr.mxu0 0.0
    %1074 = vmatpush2.msra.mxu0 %v1002
    %1075 = vmatprep.subr.mxu0 0.0
    %1076 = vmatpush2.msra.mxu0 %v1001
    %1077 = vmatprep.subr.mxu0 0.0
    %1078 = vmatpush2.msra.mxu0 %v1000
    %1079 = vmatprep.subr.mxu0 0.0
    %1080 = vmatpush2.msra.mxu0 %v999
    %1081 = vmatprep.subr.mxu0 0.0
    %1082 = vmatpush2.msra.mxu0 %v998
    %1083 = vmatprep.subr.mxu0 0.0
    %1084 = vmatpush2.msra.mxu0 %v997
    %1085 = vmatprep.mubr.f32.mxu0 %v942
    %1086 = vmatmul.mubr.f32.gmra.mxu0 %v867
    %v1087 = vpop.f32.mrf.mxu0
    %v1088 = vadd.f32 %v1019, %v1087
    %v1089 = vpop.f32.mrf.mxu0
    %1090 = vmatprep.mubr.f32.mxu0 %v947
    %1091 = vmatmul.mubr.f32.gmra.mxu0 %v868
    %v1092 = vpop.f32.mrf.mxu0
    %v1093 = vadd.f32 %v1019, %v1092
    %v1094 = vpop.f32.mrf.mxu0
    %1095 = vmatprep.mubr.f32.mxu0 %v952
    %1096 = vmatmul.mubr.f32.gmra.mxu0 %v869
    %v1097 = vpop.f32.mrf.mxu0
    %v1098 = vadd.f32 %v1019, %v1097
    %v1099 = vpop.f32.mrf.mxu0
    %1100 = vmatprep.mubr.f32.mxu0 %v957
    %1101 = vmatmul.mubr.f32.gmra.mxu0 %v870
    %v1102 = vpop.f32.mrf.mxu0
    %v1103 = vadd.f32 %v1019, %v1102
    %v1104 = vpop.f32.mrf.mxu0
    %1105 = vmatprep.mubr.f32.mxu0 %v962
    %1106 = vmatmul.mubr.f32.gmra.mxu0 %v871
    %v1107 = vpop.f32.mrf.mxu0
    %v1108 = vadd.f32 %v1019, %v1107
    %v1109 = vpop.f32.mrf.mxu0
    %1110 = vmatprep.mubr.f32.mxu0 %v967
    %1111 = vmatmul.mubr.f32.gmra.mxu0 %v872
    %v1112 = vpop.f32.mrf.mxu0
    %v1113 = vadd.f32 %v1019, %v1112
    %v1114 = vpop.f32.mrf.mxu0
    %1115 = vmatprep.mubr.f32.mxu0 %v972
    %1116 = vmatmul.mubr.f32.gmra.mxu0 %v873
    %v1117 = vpop.f32.mrf.mxu0
    %v1118 = vadd.f32 %v1019, %v1117
    %v1119 = vpop.f32.mrf.mxu0
    %1120 = vmatprep.mubr.f32.mxu0 %v977
    %1121 = vmatmul.mubr.f32.gmra.mxu0 %v874
    %v1122 = vpop.f32.mrf.mxu0
    %v1123 = vadd.f32 %v1019, %v1122
    %v1124 = vpop.f32.mrf.mxu0
    %1125 = vdwg.mxu0
    %1126 = vst [vmem:[#allocation8] sm:$0xff] %v1088
    %1127 = vst [vmem:[#allocation8 + $0x8] sm:$0xff] %v1093
    %1128 = vst [vmem:[#allocation8 + $0x10] sm:$0xff] %v1098
    %1129 = vst [vmem:[#allocation8 + $0x18] sm:$0xff] %v1103
    %1130 = vst [vmem:[#allocation8 + $0x20] sm:$0xff] %v1108
    %1131 = vst [vmem:[#allocation8 + $0x28] sm:$0xff] %v1113
    %1132 = vst [vmem:[#allocation8 + $0x30] sm:$0xff] %v1118
    %1133 = vst [vmem:[#allocation8 + $0x38] sm:$0xff] %v1123
    // Predicated region
    $region30: #{tpu_custom_call.1} parent=1 // pred_check
      _
    $region31: #{tpu_custom_call.1} parent=1 // pred_check_branch
      %1135 = sbr.rel (0) target = $region33
    $region32: #{tpu_custom_call.1} parent=1 // pred_region
      %s1137 = ssub.s32 1024, 1024
      %1138 = vsyncadd [#allocation4], %s1137
      %s1139 = sshll.u32 [#allocation8], 4
      %s1140 = int_to_ptr.vmem [resolvable:$true] %s1139
      %1145 = dma.vmem_to_hbm [thread:$0]  %s1140, 1024, %s4, [#allocation4], 128, 128, 8
    $region33: #{tpu_custom_call.1} parent=1 // pred_fallthru
      _
    // Predicated region
    $region34: #{tpu_custom_call.1} parent=1 // pred_check
      _
    $region35: #{tpu_custom_call.1} parent=1 // pred_check_branch
      %1147 = sbr.rel (0) target = $region37
    $region36: #{tpu_custom_call.1} parent=1 // pred_region
      %1148 = dma.done [#allocation4], 1024
    $region37: #{tpu_custom_call.1} parent=1 // pred_fallthru
      _
    %1149 = vsyncpa [#allocation3], 1
    %1150 = vsyncpa [#allocation6], 1
    %1151 = vsyncpa [#allocation4], 1

</llo_original>
